<compile_context>
chip_gen: v7x
topology: tpu7x:2x2x1
jax: 0.10.0
libtpu: 0.0.40
codegen_flags: <defaults>
</compile_context>

<pallas_src>
import functools

import jax
import jax.numpy as jnp
from jax import lax
from jax.experimental import pallas as pl
from jax.experimental.pallas import tpu as pltpu


def _mcmeanmil_kernel(x_ref, w_ref, b_ref, yprobs_t_ref, psum_ref, acc_ref,
                      *, n_valid):
    core = pl.program_id(0)
    j = pl.program_id(1)
    tiles_per_core = pl.num_programs(1)

    @pl.when(j == 0)
    def _init():
        acc_ref[...] = jnp.zeros_like(acc_ref)

    x = x_ref[...]                        # (tile_n, D), native dtype
    w = w_ref[...]                        # (C, D), native dtype

    # Lane-dense matmul: contract over D (last dim of both operands) ->
    # (C, tile_n).  Same contraction pattern as flash-attention q.k^T; no
    # materialized transpose of the large x tile.  MXU accumulates in f32.
    y_t = lax.dot_general(
        w, x,
        dimension_numbers=(((1,), (1,)), ((), ())),
        preferred_element_type=jnp.float32,
    )                                     # (C, tile_n), pre-bias, f32

    # Lane-dense store of this tile of Y_probs^T (bias added here only).
    yprobs_t_ref[...] = (y_t + b_ref[...].astype(jnp.float32)
                         ).astype(yprobs_t_ref.dtype)

    tile_n = y_t.shape[1]
    g = core * tiles_per_core + j         # unclamped global tile index
    start = g * tile_n

    # Hot path: fully valid tile -> plain unmasked lane reduce.
    @pl.when(start + tile_n <= n_valid)
    def _full():
        acc_ref[...] += jnp.sum(y_t, axis=1, keepdims=True)

    # Ragged tail tile only: mask out the out-of-bounds (garbage) columns.
    # (Duplicated clamp tiles have start >= n_valid and are skipped entirely.)
    @pl.when(jnp.logical_and(start < n_valid, start + tile_n > n_valid))
    def _tail():
        col = lax.broadcasted_iota(jnp.int32, y_t.shape, 1) + start
        acc_ref[...] += jnp.sum(jnp.where(col < n_valid, y_t, 0.0),
                                axis=1, keepdims=True)

    @pl.when(j == tiles_per_core - 1)
    def _finalize():
        psum_ref[0] = acc_ref[...]        # this core's pre-bias partial sum


def _vmem_budgets():
    """(per-x-buffer bytes, vmem_limit_bytes) tuned per TPU generation."""
    cap = None
    try:
        cap = pltpu.get_tpu_info().vmem_capacity_bytes
    except Exception:
        cap = None
    if cap is not None and cap >= 100 * 1024 * 1024:
        # v5e / v6e: 128 MiB VMEM -> larger tiles amortize per-step overhead.
        return 16 * 1024 * 1024, 64 * 1024 * 1024
    # v7x (64 MiB per TC) or unknown: conservative.
    return 8 * 1024 * 1024, 48 * 1024 * 1024


def _choose_tile_n(n, d, x_itemsize, c, per_buf_bytes):
    # Byte-based sizing (no hard row cap): target per_buf_bytes per x buffer,
    # lane-aligned (multiple of 128).  Also bound by the Y_probs^T tile size.
    denom = max(x_itemsize * d, 4 * c, 1)
    rows = per_buf_bytes // denom
    rows = max(128, (rows // 128) * 128)
    if n <= rows:
        return n          # single block covering the whole (unpadded) bag
    return rows


def _make_x_spec(tile_n, d, index_map, buffers):
    if buffers > 2:
        try:
            return pl.BlockSpec((tile_n, d), index_map,
                                pipeline_mode=pl.Buffered(buffers))
        except Exception:
            pass          # older Pallas: fall back to default double-buffering
    return pl.BlockSpec((tile_n, d), index_map)


def mcmeanmil_forward(x, w, b, *, tile_n=None):
    """mcmeanmil forward.

    x: (N, D); w: (C, D) (PyTorch nn.Linear layout); b: (C,).
    Returns (Y_prob (C,), Y_probs (N, C)).
    """
    n, d = x.shape
    c = w.shape[0]
    out_dtype = jnp.promote_types(x.dtype, w.dtype)
    x_itemsize = jnp.dtype(x.dtype).itemsize

    per_buf_bytes, vmem_limit = _vmem_budgets()
    if tile_n is None:
        tile_n = _choose_tile_n(n, d, x_itemsize, c, per_buf_bytes)

    total_tiles = pl.cdiv(n, tile_n)
    num_cores = 2 if total_tiles >= 2 else 1        # v7x megacore split
    tiles_per_core = pl.cdiv(total_tiles, num_cores)

    # Global tile index for (core, j).  When the split is uneven, clamp so no
    # block index is ever out of range: the duplicated tile recomputes and
    # rewrites identical data (consecutive same block -> single writeback) and
    # is excluded from the accumulator inside the kernel (start >= n).
    if num_cores * tiles_per_core > total_tiles:
        def tile_index(core, j):
            return jnp.minimum(core * tiles_per_core + j, total_tiles - 1)
    else:
        def tile_index(core, j):
            return core * tiles_per_core + j

    b2 = b.reshape(c, 1)

    kernel = functools.partial(_mcmeanmil_kernel, n_valid=n)

    x_spec = _make_x_spec(
        tile_n, d, lambda core, j: (tile_index(core, j), 0),
        buffers=3 if tiles_per_core >= 3 else 2)

    try:
        cost = pl.CostEstimate(
            flops=2 * n * d * c,
            transcendentals=0,
            bytes_accessed=(n * d * x_itemsize
                            + c * d * jnp.dtype(w.dtype).itemsize
                            + n * c * jnp.dtype(out_dtype).itemsize
                            + num_cores * c * 4),
        )
    except Exception:
        cost = None

    yprobs_t, psums = pl.pallas_call(
        kernel,
        out_shape=(
            jax.ShapeDtypeStruct((c, n), out_dtype),             # Y_probs^T
            jax.ShapeDtypeStruct((num_cores, c, 1), jnp.float32),  # per-core sums
        ),
        grid_spec=pltpu.PrefetchScalarGridSpec(
            num_scalar_prefetch=0,
            grid=(num_cores, tiles_per_core),
            in_specs=[
                x_spec,                                             # x tiles
                pl.BlockSpec((c, d), lambda core, j: (0, 0)),       # W (C, D)
                pl.BlockSpec((c, 1), lambda core, j: (0, 0)),       # bias
            ],
            out_specs=(
                pl.BlockSpec((c, tile_n),
                             lambda core, j: (0, tile_index(core, j))),
                pl.BlockSpec((1, c, 1), lambda core, j: (core, 0, 0)),
            ),
            scratch_shapes=[pltpu.VMEM((c, 1), jnp.float32)],
        ),
        compiler_params=pltpu.CompilerParams(
            dimension_semantics=("parallel", "arbitrary"),
            vmem_limit_bytes=vmem_limit,
        ),
        cost_estimate=cost,
    )(x, w, b2)

    # Combine per-core partial sums, add bias once, divide by true N.
    y_prob = (psums.sum(axis=0).reshape(c) / jnp.float32(n)
              + b.astype(jnp.float32)).astype(out_dtype)
    # Layout plumbing back to the PyTorch (N, C) contract.  If the downstream
    # consumer can take (C, N), this transpose can be skipped.
    y_probs = yprobs_t.T
    return y_prob, y_probs


if __name__ == "__main__":
    key = jax.random.PRNGKey(0)
    k1, k2, k3 = jax.random.split(key, 3)

    def _check(n, d, c, k, tile_n=None):
        kx, kw, kb = jax.random.split(k, 3)
        x = jax.random.normal(kx, (n, d), dtype=jnp.float32)
        w = jax.random.normal(kw, (c, d), dtype=jnp.float32) * 0.1
        b = jax.random.normal(kb, (c,), dtype=jnp.float32) * 0.01

        y_prob, y_probs = mcmeanmil_forward(x, w, b, tile_n=tile_n)
        jax.block_until_ready((y_prob, y_probs))

        y_ref = x @ w.T + b
        assert y_probs.shape == (n, c)
        assert jnp.allclose(y_probs, y_ref, atol=1e-4, rtol=1e-4)
        assert jnp.allclose(y_prob, jnp.mean(y_ref, axis=0), atol=1e-4, rtol=1e-4)

    # Small bag: single-block path (block == full array, no masking).
    _check(8, 32, 4, k1)
    # Ragged bag: partial last block (no wrapper pad), 2-core split with a
    # clamped duplicate tile on core 1.
    _check(300, 128, 4, k2, tile_n=128)
    # Even split across the two-core grid, no ragged tail.
    _check(256, 64, 4, k3, tile_n=128)

    print("KERNEL_OK")
</pallas_src>

<mosaic_0001>
module attributes {stable_mosaic.version = 11 : i64} {
  func.func @_mcmeanmil_kernel(%arg0: i32, %arg1: i32, %arg2: memref<8x32xf32, #tpu.memory_space<vmem>>, %arg3: memref<4x32xf32, #tpu.memory_space<vmem>>, %arg4: memref<4x1xf32, #tpu.memory_space<vmem>>, %arg5: memref<4x8xf32, #tpu.memory_space<vmem>>, %arg6: memref<1x4x1xf32, #tpu.memory_space<vmem>>, %arg7: memref<4x1xf32, #tpu.memory_space<vmem>>) attributes {dimension_semantics = [#tpu.dimension_semantics<parallel>, #tpu.dimension_semantics<arbitrary>], iteration_bounds = array<i64: 1, 1>, scalar_prefetch = 0 : i64, scratch_operands = 1 : i64, tpu.core_type = #tpu.core_type<tc>, window_params = [{transform_indices = @transform_0, window_bounds = array<i64: 8, 32>}, {pipeline_mode = #tpu.pipeline_mode<synchronous>, transform_indices = @transform_1, window_bounds = array<i64: 4, 32>}, {pipeline_mode = #tpu.pipeline_mode<synchronous>, transform_indices = @transform_2, window_bounds = array<i64: 4, 1>}, {transform_indices = @transform_3, window_bounds = array<i64: 4, 8>}, {transform_indices = @transform_4, window_bounds = array<i64: 1, 4, 1>}]} {
    %c0_i32 = arith.constant 0 : i32
    %0 = arith.cmpi eq, %arg1, %c0_i32 : i32
    %1 = arith.extui %0 : i1 to i32
    %c0_i32_0 = arith.constant 0 : i32
    %2 = arith.cmpi ne, %1, %c0_i32_0 : i32
    scf.if %2 {
      %cst_17 = arith.constant 0.000000e+00 : f32
      %26 = vector.broadcast %cst_17 : f32 to vector<4x1xf32>
      %c0_18 = arith.constant 0 : index
      %c0_19 = arith.constant 0 : index
      %27 = vector.load %arg7[%c0_18, %c0_19] : memref<4x1xf32, #tpu.memory_space<vmem>>, vector<4x1xf32>
      tpu.vector_store %arg7[%c0_18, %c0_19], %26 {strides = array<i32>} : memref<4x1xf32, #tpu.memory_space<vmem>>, vector<4x1xf32>,
    } else {
    }
    %c0 = arith.constant 0 : index
    %c0_1 = arith.constant 0 : index
    %3 = vector.load %arg2[%c0, %c0_1] : memref<8x32xf32, #tpu.memory_space<vmem>>, vector<8x32xf32>
    %c0_2 = arith.constant 0 : index
    %c0_3 = arith.constant 0 : index
    %4 = vector.load %arg3[%c0_2, %c0_3] : memref<4x32xf32, #tpu.memory_space<vmem>>, vector<4x32xf32>
    %cst = arith.constant dense<0.000000e+00> : vector<4x8xf32>
    %5 = tpu.matmul %4, %3, %cst {dimension_numbers = #tpu.dot_dimension_numbers<[1], [1], [0], [0], [0, 0, 1, 0], [], []>} : vector<4x32xf32>, vector<8x32xf32>, vector<4x8xf32> -> vector<4x8xf32>
    %c0_4 = arith.constant 0 : index
    %c0_5 = arith.constant 0 : index
    %6 = vector.load %arg4[%c0_4, %c0_5] : memref<4x1xf32, #tpu.memory_space<vmem>>, vector<4x1xf32>
    %7 = vector.broadcast %6 : vector<4x1xf32> to vector<4x8xf32>
    %8 = arith.addf %5, %7 : vector<4x8xf32>
    %c0_6 = arith.constant 0 : index
    %c0_7 = arith.constant 0 : index
    %9 = vector.load %arg5[%c0_6, %c0_7] : memref<4x8xf32, #tpu.memory_space<vmem>>, vector<4x8xf32>
    tpu.vector_store %arg5[%c0_6, %c0_7], %8 {strides = array<i32>} : memref<4x8xf32, #tpu.memory_space<vmem>>, vector<4x8xf32>,
    %c1_i32 = arith.constant 1 : i32
    %10 = arith.muli %arg0, %c1_i32 : i32
    %11 = arith.addi %10, %arg1 : i32
    %c8_i32 = arith.constant 8 : i32
    %12 = arith.muli %11, %c8_i32 : i32
    %c8_i32_8 = arith.constant 8 : i32
    %13 = arith.addi %12, %c8_i32_8 : i32
    %c8_i32_9 = arith.constant 8 : i32
    %14 = arith.cmpi sle, %13, %c8_i32_9 : i32
    %15 = arith.extui %14 : i1 to i32
    %c0_i32_10 = arith.constant 0 : i32
    %16 = arith.cmpi ne, %15, %c0_i32_10 : i32
    scf.if %16 {
      %c0_17 = arith.constant 0 : index
      %c0_18 = arith.constant 0 : index
      %26 = vector.load %arg7[%c0_17, %c0_18] : memref<4x1xf32, #tpu.memory_space<vmem>>, vector<4x1xf32>
      %cst_19 = arith.constant dense<0.000000e+00> : vector<4xf32>
      %27 = vector.multi_reduction <add>, %5, %cst_19 [1] : vector<4x8xf32> to vector<4xf32>
      %28 = vector.shape_cast %27 : vector<4xf32> to vector<4x1xf32>
      %29 = arith.addf %26, %28 : vector<4x1xf32>
      %c0_20 = arith.constant 0 : index
      %c0_21 = arith.constant 0 : index
      %30 = vector.load %arg7[%c0_20, %c0_21] : memref<4x1xf32, #tpu.memory_space<vmem>>, vector<4x1xf32>
      tpu.vector_store %arg7[%c0_20, %c0_21], %29 {strides = array<i32>} : memref<4x1xf32, #tpu.memory_space<vmem>>, vector<4x1xf32>,
    } else {
    }
    %c8_i32_11 = arith.constant 8 : i32
    %17 = arith.cmpi slt, %12, %c8_i32_11 : i32
    %c8_i32_12 = arith.constant 8 : i32
    %18 = arith.addi %12, %c8_i32_12 : i32
    %c8_i32_13 = arith.constant 8 : i32
    %19 = arith.cmpi sgt, %18, %c8_i32_13 : i32
    %20 = arith.andi %17, %19 : i1
    %21 = arith.extui %20 : i1 to i32
    %c0_i32_14 = arith.constant 0 : i32
    %22 = arith.cmpi ne, %21, %c0_i32_14 : i32
    scf.if %22 {
      %26 = tpu.iota {dimensions = array<i32: 1>} : vector<4x8xi32>
      %27 = vector.broadcast %12 : i32 to vector<4x8xi32>
      %28 = arith.addi %26, %27 : vector<4x8xi32>
      %c0_17 = arith.constant 0 : index
      %c0_18 = arith.constant 0 : index
      %29 = vector.load %arg7[%c0_17, %c0_18] : memref<4x1xf32, #tpu.memory_space<vmem>>, vector<4x1xf32>
      %c8_i32_19 = arith.constant 8 : i32
      %30 = vector.broadcast %c8_i32_19 : i32 to vector<4x8xi32>
      %31 = arith.cmpi slt, %28, %30 : vector<4x8xi32>
      %cst_20 = arith.constant 0.000000e+00 : f32
      %32 = vector.broadcast %cst_20 : f32 to vector<4x8xf32>
      %33 = arith.select %31, %5, %32 : vector<4x8xi1>, vector<4x8xf32>
      %cst_21 = arith.constant dense<0.000000e+00> : vector<4xf32>
      %34 = vector.multi_reduction <add>, %33, %cst_21 [1] : vector<4x8xf32> to vector<4xf32>
      %35 = vector.shape_cast %34 : vector<4xf32> to vector<4x1xf32>
      %36 = arith.addf %29, %35 : vector<4x1xf32>
      %c0_22 = arith.constant 0 : index
      %c0_23 = arith.constant 0 : index
      %37 = vector.load %arg7[%c0_22, %c0_23] : memref<4x1xf32, #tpu.memory_space<vmem>>, vector<4x1xf32>
      tpu.vector_store %arg7[%c0_22, %c0_23], %36 {strides = array<i32>} : memref<4x1xf32, #tpu.memory_space<vmem>>, vector<4x1xf32>,
    } else {
    }
    %c0_i32_15 = arith.constant 0 : i32
    %23 = arith.cmpi eq, %arg1, %c0_i32_15 : i32
    %24 = arith.extui %23 : i1 to i32
    %c0_i32_16 = arith.constant 0 : i32
    %25 = arith.cmpi ne, %24, %c0_i32_16 : i32
    scf.if %25 {
      %c0_17 = arith.constant 0 : index
      %c0_18 = arith.constant 0 : index
      %26 = vector.load %arg7[%c0_17, %c0_18] : memref<4x1xf32, #tpu.memory_space<vmem>>, vector<4x1xf32>
      %c0_19 = arith.constant 0 : index
      %c0_20 = arith.constant 0 : index
      %c0_21 = arith.constant 0 : index
      %27 = vector.load %arg6[%c0_19, %c0_20, %c0_21] : memref<1x4x1xf32, #tpu.memory_space<vmem>>, vector<1x4x1xf32>
      %28 = vector.shape_cast %27 : vector<1x4x1xf32> to vector<4x1xf32>
      %29 = vector.shape_cast %26 : vector<4x1xf32> to vector<1x4x1xf32>
      tpu.vector_store %arg6[%c0_19, %c0_20, %c0_21], %29 {strides = array<i32>} : memref<1x4x1xf32, #tpu.memory_space<vmem>>, vector<1x4x1xf32>,
    } else {
    }
    return
  }
  func.func @transform_0(%arg0: i32, %arg1: i32) -> (i32, i32) {
    %c1_i32 = arith.constant 1 : i32
    %0 = arith.muli %arg0, %c1_i32 : i32
    %1 = arith.addi %0, %arg1 : i32
    %c0_i32 = arith.constant 0 : i32
    %c0_i32_0 = arith.constant 0 : i32
    return %1, %c0_i32 : i32, i32
  }
  func.func @transform_1(%arg0: i32, %arg1: i32) -> (i32, i32) {
    %c0_i32 = arith.constant 0 : i32
    %c0_i32_0 = arith.constant 0 : i32
    %c0_i32_1 = arith.constant 0 : i32
    return %c0_i32, %c0_i32_0 : i32, i32
  }
  func.func @transform_2(%arg0: i32, %arg1: i32) -> (i32, i32) {
    %c0_i32 = arith.constant 0 : i32
    %c0_i32_0 = arith.constant 0 : i32
    %c0_i32_1 = arith.constant 0 : i32
    return %c0_i32, %c0_i32_0 : i32, i32
  }
  func.func @transform_3(%arg0: i32, %arg1: i32) -> (i32, i32) {
    %c1_i32 = arith.constant 1 : i32
    %0 = arith.muli %arg0, %c1_i32 : i32
    %1 = arith.addi %0, %arg1 : i32
    %c0_i32 = arith.constant 0 : i32
    %c0_i32_0 = arith.constant 0 : i32
    return %c0_i32, %1 : i32, i32
  }
  func.func @transform_4(%arg0: i32, %arg1: i32) -> (i32, i32, i32) {
    %c0_i32 = arith.constant 0 : i32
    %c0_i32_0 = arith.constant 0 : i32
    %c0_i32_1 = arith.constant 0 : i32
    return %arg0, %c0_i32, %c0_i32_0 : i32, i32, i32
  }
}

</mosaic_0001>

<llo_original>
// kernel: tpu_custom_call.1
$region0: #{tpu_custom_call.1}
  #allocation0 [shape = 'u32[]', space=smem, size = 0x4, offset = 0x4, fixed_abs, tag = 'smem constant byte address 0x4 - core index']
  #allocation1 [shape = 'u32[144,128]{1,0:T(1,128)}', space=vmem, size = 0x12000, scoped, tag = 'internal scratch']
  #allocation2 [shape = 'f32[4,1]{1,0:T(4,128)}', space=vmem, size = 0x800, scoped, tag = 'scratch operand']
  %s0 = inlined_call_operand.hbm [shape: f32[8,32], index: 0, kind: input, shape index: {}]
  %s1 = inlined_call_operand.vmem [shape: f32[4,32], index: 1, kind: input, shape index: {}]
  %s2 = inlined_call_operand.vmem [shape: f32[4,1], index: 2, kind: input, shape index: {}]
  %s3 = inlined_call_operand.hbm [shape: f32[4,8], index: 3, kind: output, shape index: {0}]
  %s4 = inlined_call_operand.vmem [shape: f32[1,4,1], index: 4, kind: output, shape index: {1}]
  %5 = xla_tuple %s3, %s4
  %s6 = sld [smem:[#allocation0]]
  $region50: #{tpu_custom_call.1} parent=0
    _
  %s8 = ssub.s32 1, %s6
  %s9 = scalar_select 0, %s8, %s6
  $region1: #{tpu_custom_call.1} parent=0
    #allocation3 [shape = 'u8[4096]{0}', space=vmem, size = 0x1000, scoped, tag = 'input window, operand 0, single buffered']
    #allocation4 [shape = 's32[1]{0}', space=sflag, size = 0x4, scoped, tag = 'scoped memory for tpu_custom_call.1']
    #allocation5 [shape = 's32[1]{0}', space=sflag, size = 0x4, scoped, tag = 'scoped memory for tpu_custom_call.1']
    #allocation6 [shape = 'u8[2048]{0}', space=vmem, size = 0x800, scoped, tag = 'output window, operand 0, single buffered']
    %10 = vsyncpa [#allocation4], 0
    %11 = vsyncpa [#allocation5], 0
    // Predicated region
    $region2: #{tpu_custom_call.1} parent=1 // pred_check
      _
    $region3: #{tpu_custom_call.1} parent=1 // pred_check_branch
      %13 = sbr.rel (0) target = $region5
    $region4: #{tpu_custom_call.1} parent=1 // pred_region
      %s14 = sadd.s32 0, 0
      %s16 = ssub.s32 128, 128
      %17 = vsyncadd [#allocation4], %s16
      %s18 = smul.addr %s14, 128
      %s19 = scalar_lea.hbm %s0, %s18
      %s21 = sshll.u32 [#allocation3], 4
      %s22 = int_to_ptr.vmem [resolvable:$true] %s21
      %24 = dma.hbm_to_vmem [thread:$0]  %s19, 128, %s22, [#allocation4]
    $region5: #{tpu_custom_call.1} parent=1 // pred_fallthru
      _
    // Predicated region
    $region6: #{tpu_custom_call.1} parent=1 // pred_check
      _
    $region7: #{tpu_custom_call.1} parent=1 // pred_check_branch
      %26 = sbr.rel (0) target = $region9
    $region8: #{tpu_custom_call.1} parent=1 // pred_region
      _
    $region9: #{tpu_custom_call.1} parent=1 // pred_fallthru
      _
    // Predicated region
    $region10: #{tpu_custom_call.1} parent=1 // pred_check
      _
    $region11: #{tpu_custom_call.1} parent=1 // pred_check_branch
      %28 = sbr.rel (0) target = $region13
    $region12: #{tpu_custom_call.1} parent=1 // pred_region
      _
    $region13: #{tpu_custom_call.1} parent=1 // pred_fallthru
      _
    // Predicated region
    $region14: #{tpu_custom_call.1} parent=1 // pred_check
      _
    $region15: #{tpu_custom_call.1} parent=1 // pred_check_branch
      %30 = sbr.rel (0) target = $region17
    $region16: #{tpu_custom_call.1} parent=1 // pred_region
      %31 = dma.done [#allocation4], 128
    $region17: #{tpu_custom_call.1} parent=1 // pred_fallthru
      _
    %s32 = sadd.s32 0, 0
    %s33 = sadd.s32 0, 0
    %p34 = scmp.eq.s32.totalorder 0, 0
    // Predicated region
    $region18: #{tpu_custom_call.1} parent=1 // pred_check
      %p35 = pneg %p34
    $region19: #{tpu_custom_call.1} parent=1 // pred_check_branch
      %37 = sbr.rel (%p35) target = $region21
    $region20: #{tpu_custom_call.1} parent=1 // pred_region
      %vm38 = vcmask 3072
      %39 = vst.msk [vmem:[#allocation2] sm:$0xf] %vm38, 0.0
    $region21: #{tpu_custom_call.1} parent=1 // pred_fallthru
      _
    %v40 = vld [vmem:[#allocation3] sm:$0xff]
    %v41 = vld [vmem:[%s1] sm:$0xf]
    %vm42 = vcmask 261120
    %v44 = vsel %vm42, %v41, 0
    %v47 = vsel %vm42, %v40, 0
    %49 = vmatprep.subr.mxu0 0.0
    %50 = vmatpush1.xpose.msra.mxu0 %v47
    %51 = vmatprep.subr.mxu0 0.0
    %52 = vmatpush1.xpose.msra.mxu0 0.0
    %53 = vmatprep.subr.mxu0 0.0
    %54 = vmatpush1.xpose.msra.mxu0 0.0
    %55 = vmatprep.subr.mxu0 0.0
    %56 = vmatpush1.xpose.msra.mxu0 0.0
    %57 = vmatprep.subr.mxu0 0.0
    %58 = vmatpush1.xpose.msra.mxu0 0.0
    %59 = vmatprep.subr.mxu0 0.0
    %60 = vmatpush1.xpose.msra.mxu0 0.0
    %61 = vmatprep.subr.mxu0 0.0
    %62 = vmatpush1.xpose.msra.mxu0 0.0
    %63 = vmatprep.subr.mxu0 0.0
    %64 = vmatpush1.xpose.msra.mxu0 0.0
    %65 = vmatprep.subr.mxu0 0.0
    %66 = vmatpush1.xpose.msra.mxu0 0.0
    %67 = vmatprep.subr.mxu0 0.0
    %68 = vmatpush1.xpose.msra.mxu0 0.0
    %69 = vmatprep.subr.mxu0 0.0
    %70 = vmatpush1.xpose.msra.mxu0 0.0
    %71 = vmatprep.subr.mxu0 0.0
    %72 = vmatpush1.xpose.msra.mxu0 0.0
    %73 = vmatprep.subr.mxu0 0.0
    %74 = vmatpush1.xpose.msra.mxu0 0.0
    %75 = vmatprep.subr.mxu0 0.0
    %76 = vmatpush1.xpose.msra.mxu0 0.0
    %77 = vmatprep.subr.mxu0 0.0
    %78 = vmatpush1.xpose.msra.mxu0 0.0
    %79 = vmatprep.subr.mxu0 0.0
    %80 = vmatpush1.xpose.msra.mxu0 0.0
    %81 = vmatprep.subr.mxu0 0.0
    %82 = vmatpush1.xpose.msra.mxu0 0.0
    %83 = vmatprep.subr.mxu0 0.0
    %84 = vmatpush1.xpose.msra.mxu0 0.0
    %85 = vmatprep.subr.mxu0 0.0
    %86 = vmatpush1.xpose.msra.mxu0 0.0
    %87 = vmatprep.subr.mxu0 0.0
    %88 = vmatpush1.xpose.msra.mxu0 0.0
    %89 = vmatprep.subr.mxu0 0.0
    %90 = vmatpush1.xpose.msra.mxu0 0.0
    %91 = vmatprep.subr.mxu0 0.0
    %92 = vmatpush1.xpose.msra.mxu0 0.0
    %93 = vmatprep.subr.mxu0 0.0
    %94 = vmatpush1.xpose.msra.mxu0 0.0
    %95 = vmatprep.subr.mxu0 0.0
    %96 = vmatpush1.xpose.msra.mxu0 0.0
    %97 = vmatprep.subr.mxu0 0.0
    %98 = vmatpush1.xpose.msra.mxu0 0.0
    %99 = vmatprep.subr.mxu0 0.0
    %100 = vmatpush1.xpose.msra.mxu0 0.0
    %101 = vmatprep.subr.mxu0 0.0
    %102 = vmatpush1.xpose.msra.mxu0 0.0
    %103 = vmatprep.subr.mxu0 0.0
    %104 = vmatpush1.xpose.msra.mxu0 0.0
    %105 = vmatprep.subr.mxu0 0.0
    %106 = vmatpush1.xpose.msra.mxu0 0.0
    %107 = vmatprep.subr.mxu0 0.0
    %108 = vmatpush1.xpose.msra.mxu0 0.0
    %109 = vmatprep.subr.mxu0 0.0
    %110 = vmatpush1.xpose.msra.mxu0 0.0
    %111 = vmatprep.subr.mxu0 0.0
    %112 = vmatpush1.xpose.msra.mxu0 0.0
    %113 = vmatprep.mubr.f32.mxu0 0.0
    %114 = vmatmul.mubr.f32.gmra.mrb[0].mxu0 %v44
    %v115 = vpop.f32.mrb[0].mxu0
    %v116 = vadd.f32 0.0, %v115
    %v117 = vpop.f32.mrb[0].mxu0
    %118 = vdwg.mxu0
    %v119 = vld [vmem:[%s2] sm:$0xf]
    %121 = vset.pattern.permute.xlu0 0
    %122 = vperm.xlu0 %121, %v119
    %v123 = vpop.permute.xlu0 %122
    %v125 = vadd.f32 %v116, %v123
    %vm126 = vcmask 60416
    %127 = vst.msk [vmem:[#allocation6] sm:$0xf] %vm126, %v125
    %s128 = sadd.s32 0, 0
    %s129 = smul.u32 %s128, 8
    %s130 = sadd.s32 %s129, 8
    %p131 = scmp.le.s32.totalorder %s130, 8
    // Predicated region
    $region22: #{tpu_custom_call.1} parent=1 // pred_check
      %p132 = pneg %p131
    $region23: #{tpu_custom_call.1} parent=1 // pred_check_branch
      %134 = sbr.rel (%p132) target = $region25
    $region24: #{tpu_custom_call.1} parent=1 // pred_region
      %v135 = vld [vmem:[#allocation2] sm:$0xf]
      %v136 = vsel %vm126, %v116, 0.0
      %137 = vadd.xlane.f32.xlu0 %v136
      %v138 = vpop.xlane.xlu0 %137
      %v139 = vadd.f32 %v135, %v138
      %vm140 = vcmask 3072
      %141 = vst.msk [vmem:[#allocation2] sm:$0xf] %vm140, %v139
    $region25: #{tpu_custom_call.1} parent=1 // pred_fallthru
      _
    %p142 = scmp.lt.s32.totalorder %s129, 8
    %p143 = scmp.gt.s32.totalorder %s130, 8
    %p144 = pnand %p142, %p143
    %p145 = pneg %p144
    // Predicated region
    $region26: #{tpu_custom_call.1} parent=1 // pred_check
      _
    $region27: #{tpu_custom_call.1} parent=1 // pred_check_branch
      %147 = sbr.rel (%p144) target = $region29
    $region28: #{tpu_custom_call.1} parent=1 // pred_region
      %v148 = vlaneseq
      %v149 = vand.u32 %v148, 127
      %v150 = vstv %s129
      %v151 = vadd.s32 %v149, %v150
      %v152 = vld [vmem:[#allocation2] sm:$0xf]
      %vm153 = vcmp.lt.s32.totalorder %v151, 8
      %v154 = vsel %vm153, %v116, 0.0
      %v155 = vsel %vm126, %v154, 0.0
      %156 = vadd.xlane.f32.xlu0 %v155
      %v157 = vpop.xlane.xlu0 %156
      %v158 = vadd.f32 %v152, %v157
      %vm159 = vcmask 3072
      %160 = vst.msk [vmem:[#allocation2] sm:$0xf] %vm159, %v158
    $region29: #{tpu_custom_call.1} parent=1 // pred_fallthru
      _
    // Predicated region
    $region30: #{tpu_custom_call.1} parent=1 // pred_check
      %p161 = pneg %p34
    $region31: #{tpu_custom_call.1} parent=1 // pred_check_branch
      %163 = sbr.rel (%p161) target = $region33
    $region32: #{tpu_custom_call.1} parent=1 // pred_region
      %v164 = vld [vmem:[#allocation2] sm:$0xf]
      %vm165 = vcmask 3072
      %166 = vst.msk [vmem:[%s4] sm:$0xf] %vm165, %v164
    $region33: #{tpu_custom_call.1} parent=1 // pred_fallthru
      _
    // Predicated region
    $region34: #{tpu_custom_call.1} parent=1 // pred_check
      _
    $region35: #{tpu_custom_call.1} parent=1 // pred_check_branch
      %168 = sbr.rel (0) target = $region37
    $region36: #{tpu_custom_call.1} parent=1 // pred_region
      %s169 = sadd.s32 0, 0
      %s171 = ssub.s32 64, 64
      %172 = vsyncadd [#allocation5], %s171
      %s173 = smul.addr %s169, 64
      %s174 = scalar_lea.hbm %s3, %s173
      %s176 = sshll.u32 [#allocation6], 4
      %s177 = int_to_ptr.vmem [resolvable:$true] %s176
      %179 = dma.vmem_to_hbm [thread:$0]  %s177, 64, %s174, [#allocation5]
    $region37: #{tpu_custom_call.1} parent=1 // pred_fallthru
      _
    // Predicated region
    $region38: #{tpu_custom_call.1} parent=1 // pred_check
      _
    $region39: #{tpu_custom_call.1} parent=1 // pred_check_branch
      %181 = sbr.rel (0) target = $region41
    $region40: #{tpu_custom_call.1} parent=1 // pred_region
      _
    $region41: #{tpu_custom_call.1} parent=1 // pred_fallthru
      _
    // Predicated region
    $region42: #{tpu_custom_call.1} parent=1 // pred_check
      _
    $region43: #{tpu_custom_call.1} parent=1 // pred_check_branch
      %183 = sbr.rel (0) target = $region45
    $region44: #{tpu_custom_call.1} parent=1 // pred_region
      %184 = dma.done [#allocation5], 64
    $region45: #{tpu_custom_call.1} parent=1 // pred_fallthru
      _
    // Predicated region
    $region46: #{tpu_custom_call.1} parent=1 // pred_check
      _
    $region47: #{tpu_custom_call.1} parent=1 // pred_check_branch
      %186 = sbr.rel (0) target = $region49
    $region48: #{tpu_custom_call.1} parent=1 // pred_region
      _
    $region49: #{tpu_custom_call.1} parent=1 // pred_fallthru
      _
    %187 = vsyncpa [#allocation4], 1
    %188 = vsyncpa [#allocation5], 1

</llo_original>
